<compile_context>
chip_gen: v7x
topology: tpu7x:2x2x1
jax: 0.10.0
libtpu: 0.0.40
codegen_flags: <defaults>
</compile_context>

<pallas_src>
from functools import reduce

import jax
import jax.numpy as jnp
from jax.experimental import pallas as pl
from jax.experimental.pallas import tpu as pltpu


# ---------------------------------------------------------------------------
# Pallas kernel: identity via a single HBM->HBM DMA
# ---------------------------------------------------------------------------
def _dma_identity_kernel(x_hbm_ref, o_hbm_ref, sem):
    # One whole-array DMA: the DMA engine alone saturates HBM for a pure
    # copy, so there is no benefit to tiling this through VMEM.
    cp = pltpu.make_async_copy(x_hbm_ref, o_hbm_ref, sem)
    cp.start()
    cp.wait()


def pallas_identity(x: jax.Array, *, elide: bool = False) -> jax.Array:
    """nn.Identity implemented as a Pallas TPU kernel.

    With elide=True the copy is skipped entirely (semantically exact and the
    fastest possible realization of nn.Identity).  The default keeps a real
    kernel: a single HBM->HBM async copy covering the whole array, valid for
    any shape/dtype, with zero VMEM round trip and zero grid overhead.
    """
    if elide or x.size == 0:
        # Short-circuit: removes 100% of HBM read+write traffic.
        return x

    itemsize = jnp.dtype(x.dtype).itemsize
    return pl.pallas_call(
        _dma_identity_kernel,
        out_shape=jax.ShapeDtypeStruct(x.shape, x.dtype),
        # Leave both operands in place (HBM); the kernel body does the DMA.
        in_specs=[pl.BlockSpec(memory_space=pl.ANY)],
        out_specs=pl.BlockSpec(memory_space=pl.ANY),
        scratch_shapes=[pltpu.SemaphoreType.DMA(())],
        cost_estimate=pl.CostEstimate(
            flops=0,
            transcendentals=0,
            bytes_accessed=2 * x.size * itemsize,
        ),
    )(x)


# ---------------------------------------------------------------------------
# model_utils.sum_multi_modal_shapes equivalent
# ---------------------------------------------------------------------------
def sum_multi_modal_shapes(shapes):
    total = 0
    for shape in shapes:
        if isinstance(shape, (tuple, list)):
            total += reduce(lambda a, b: a * b, shape, 1)
        else:
            total += int(shape)
    return total


# ---------------------------------------------------------------------------
# JAX/Pallas port of NetworkInterface
# ---------------------------------------------------------------------------
class NetworkInterface:
    """JAX port of the PyTorch NetworkInterface base class.

    Keeps the shape bookkeeping and the temp_predictor (nn.Identity ->
    Pallas HBM->HBM DMA kernel).  `forward` mirrors the base-class contract
    (NotImplementedError); `apply_temp_predictor` is the runnable compute.
    """

    def __init__(self, in_shapes, out_shapes, cfg=None):
        if isinstance(in_shapes, tuple):
            in_shapes = [in_shapes]
        if isinstance(out_shapes, tuple):
            out_shapes = [out_shapes]
        cfg = {} if cfg is None else cfg
        self.cfg = cfg
        self.in_shapes = in_shapes
        self.out_shapes = out_shapes
        self.in_features = sum_multi_modal_shapes(in_shapes)
        self.out_features = sum_multi_modal_shapes(out_shapes)
        self.pretrained = cfg.get("pretrained")
        # nn.Identity() -> Pallas identity kernel (single HBM->HBM DMA).
        self.temp_predictor = pallas_identity
        # No learnable parameters exist in the base class (ParameterList is
        # empty), so nothing to initialize.
        self.extra_parameters = []

    def forward(self, *inputs):
        raise NotImplementedError

    def add_temp_predictor(self, predictor):
        # TODO(synk): optimizer registration (trainer.add_layer_to_optimizer)
        # has no Pallas equivalent; only the predictor swap is kept.
        self.temp_predictor = predictor

    def apply_temp_predictor(self, x):
        return self.temp_predictor(x)

    # metadata accessors (parity with the PyTorch API)
    def get_in_shapes(self):
        return self.in_shapes

    def get_out_shapes(self):
        return self.out_shapes

    def get_in_features(self):
        return self.in_features

    def get_out_features(self):
        return self.out_features


# ---------------------------------------------------------------------------
# main
# ---------------------------------------------------------------------------
if __name__ == "__main__":
    key = jax.random.PRNGKey(0)
    # NCHW input consistent with typical subclass usage.
    x = jax.random.normal(key, (2, 4, 16, 16), dtype=jnp.float32)

    net = NetworkInterface(in_shapes=[(4, 16, 16)], out_shapes=[(4, 16, 16)])

    y = net.apply_temp_predictor(x)
    y = jax.block_until_ready(y)

    assert y.shape == x.shape and y.dtype == x.dtype
    assert bool(jnp.allclose(y, x)), "identity kernel mismatch"
    assert net.get_in_features() == 4 * 16 * 16
    assert net.get_out_features() == 4 * 16 * 16

    # Elided path (true zero-cost identity) must also agree.
    y2 = jax.block_until_ready(pallas_identity(x, elide=True))
    assert bool(jnp.allclose(y2, x))

    print("KERNEL_OK")
</pallas_src>

<mosaic_0001>
module attributes {stable_mosaic.version = 11 : i64} {
  func.func @_dma_identity_kernel(%arg0: memref<2x4x16x16xf32, #tpu.memory_space<any>>, %arg1: memref<2x4x16x16xf32, #tpu.memory_space<any>>, %arg2: memref<!tpu.dma_semaphore, #tpu.memory_space<semaphore_mem>>) attributes {dimension_semantics = [], scalar_prefetch = 0 : i64, scratch_operands = 1 : i64, tpu.core_type = #tpu.core_type<tc>} {
    tpu.enqueue_dma source(%arg0 : memref<2x4x16x16xf32, #tpu.memory_space<any>>) target(%arg1 : memref<2x4x16x16xf32, #tpu.memory_space<any>>) target_semaphore(%arg2 : memref<!tpu.dma_semaphore, #tpu.memory_space<semaphore_mem>>)
    tpu.wait_dma2 semaphore(%arg2 : memref<!tpu.dma_semaphore, #tpu.memory_space<semaphore_mem>>) src(%arg0 : memref<2x4x16x16xf32, #tpu.memory_space<any>>) dst(%arg1 : memref<2x4x16x16xf32, #tpu.memory_space<any>>)
    return
  }
}

</mosaic_0001>

<llo_original>
// kernel: tpu_custom_call.1
$region0: #{tpu_custom_call.1}
  #allocation0 [shape = 'u32[]', space=smem, size = 0x4, offset = 0x4, fixed_abs, tag = 'smem constant byte address 0x4 - core index']
  #allocation1 [shape = 'u32[144,128]{1,0:T(1,128)}', space=vmem, size = 0x12000, scoped, tag = 'internal scratch']
  #allocation2 [shape = 's32[1]{0}', space=sflag, size = 0x4, scoped, tag = 'scratch operand']
  #allocation3 [shape = 's32[]', space=sflag, size = 0x4, offset = 0, fixed_abs, tag = 'sflag constant byte address 0x0 - dummy sync flag']
  #allocation4 [shape = 'u32[0]{0}', space=smem, size = 0, offset = 0, fixed_abs, tag = 'smem constant byte address 0x0 - null']
  %s0 = inlined_call_operand.hbm [shape: f32[2,4,16,16], index: 0, kind: input, shape index: {}]
  %s1 = inlined_call_operand.hbm [shape: f32[2,4,16,16], index: 1, kind: output, shape index: {}]
  %s2 = sld [smem:[#allocation0]]
  $region2: #{tpu_custom_call.1} parent=0
    _
  %s4 = ssub.s32 1, %s2
  %s5 = scalar_select 0, %s4, %s2
  %s7 = sshll.u32 1, 14
  %s8 = sxor.u32 4294967295, %s7
  %s11 = sshll.u32 3, 24
  %s12 = sxor.u32 4294967295, %s11
  %s13 = sand.u32 0, %s12
  %s15 = sor.u32 %s13, 0
  %18 = dma.general %s0, 2048, %s1, [#allocation2], [#allocation3], [#allocation4], %s15, 0
  %s19 = smul.u32 2, 4
  %s20 = smul.u32 %s19, 16
  %s21 = smul.u32 %s20, 1
  %s22 = sshll.u32 %s21, 4
  %23 = dma.done [#allocation2], %s22
  %24 = vsyncmov [#allocation2]
  %s25 = vpop.sfrf %24
  %p26 = scmp.eq.s32.totalorder %s25, 0
  %p27 = pneg %p26
  %29 = shalt.err (%p27)

</llo_original>
